<compile_context>
chip_gen: v6e
topology: v6e:2x2x1
jax: 0.10.0
libtpu: 0.0.40
codegen_flags: <defaults>
</compile_context>

<pallas_src>
import jax
import jax.numpy as jnp
from jax import lax
from jax.experimental import pallas as pl
from jax.experimental.pallas import tpu as pltpu

_TARGET_BLOCK_BYTES = 4 * 1024 * 1024   # HBM bytes per grid step (per input DMA)
_CHUNK_ELEMS = 128 * 1024                # elements per inner vreg-resident chunk


def _is_v7x():
    try:
        return "v7" in jax.devices()[0].device_kind.lower()
    except Exception:
        return False


def _make_kernel(row_block, lane, valid_rows, blocks_per_shard, chunk_rows, n_chunks):
    unroll = n_chunks <= 16

    def kernel(x_ref, o_ref, acc_ref):
        i = pl.program_id(0)          # shard axis (2 TCs on v7x, 1 elsewhere)
        j = pl.program_id(1)          # reduction axis ("arbitrary")

        @pl.when(j == 0)
        def _init():
            acc_ref[...] = jnp.zeros_like(acc_ref)

        # LOGICAL (un-clamped) block index / row offset: used both for the
        # fast/masked gate and for the row mask, so clamped duplicate reads
        # from the index_map are fully zeroed.
        blk = i * blocks_per_shard + j
        row0 = blk * row_block

        def accumulate(xs_f32):
            # VPU-only fold into the (8, lane) accumulator.
            acc_ref[...] += jnp.sqrt(xs_f32).reshape(
                chunk_rows // 8, 8, lane).sum(axis=0)

        @pl.when(row0 + row_block <= valid_rows)
        def _fast():   # steady state: load -> cast -> sqrt -> accumulate
            def body(c, carry):
                off = pl.multiple_of(c * chunk_rows, 8)
                accumulate(x_ref[pl.ds(off, chunk_rows), :].astype(jnp.float32))
                return carry
            lax.fori_loop(0, n_chunks, body, 0, unroll=unroll)

        @pl.when(row0 + row_block > valid_rows)
        def _tail():   # partial / clamped blocks: mask BEFORE sqrt
            def body(c, carry):
                off = pl.multiple_of(c * chunk_rows, 8)
                rid = row0 + off + lax.broadcasted_iota(
                    jnp.int32, (chunk_rows, lane), 0)
                xs = x_ref[pl.ds(off, chunk_rows), :].astype(jnp.float32)
                xs = jnp.where(rid < valid_rows, xs, 0.0)
                accumulate(xs)
                return carry
            lax.fori_loop(0, n_chunks, body, 0, unroll=unroll)

        @pl.when(j == pl.num_programs(1) - 1)
        def _finalize():
            o_ref[...] = jnp.sum(acc_ref[...]).reshape(1, 1)

    return kernel


def _sqrt_sum_aligned(flat, lane, sub, itemsize):
    """Kernel call on a flat array whose size is a multiple of lane*sub."""
    rows = flat.size // lane
    x2d = flat.reshape(rows, lane)          # lane-dense slab, native dtype

    # Inner chunk: ~_CHUNK_ELEMS elements, multiple of the sublane packing.
    chunk_target = max(sub, ((_CHUNK_ELEMS // lane) // sub) * sub)
    chunk_rows = min(rows, chunk_target)

    # Block sized by HBM bytes; multiple of chunk_rows; never larger than the
    # (chunk-rounded) row count.
    block_rows_by_bytes = (_TARGET_BLOCK_BYTES // itemsize) // lane
    target_rows = max(chunk_rows, (block_rows_by_bytes // chunk_rows) * chunk_rows)
    rows_ceil = pl.cdiv(rows, chunk_rows) * chunk_rows
    row_block = min(target_rows, rows_ceil)
    n_blocks = pl.cdiv(rows, row_block)
    n_chunks = row_block // chunk_rows

    is_v7 = _is_v7x()
    num_shards = 2 if (is_v7 and n_blocks >= 2) else 1   # 1 TC on v5e/v6e
    bps = pl.cdiv(n_blocks, num_shards)                  # blocks per shard

    def in_map(i, j):
        # Clamp so we never request a fully out-of-bounds block; clamped
        # re-reads are zeroed by the (gated) in-kernel logical-row mask.
        return (jnp.minimum(i * bps + j, n_blocks - 1), 0)

    in_spec = pl.BlockSpec((row_block, lane), in_map)
    if bps >= 3:
        try:   # deeper pipelining for the single streaming input
            in_spec = pl.BlockSpec((row_block, lane), in_map,
                                   pipeline_mode=pl.Buffered(3))
        except TypeError:
            pass

    kernel = _make_kernel(row_block, lane, rows, bps, chunk_rows, n_chunks)

    sems = ("parallel", "arbitrary") if num_shards == 2 else ("arbitrary", "arbitrary")
    vmem_cap = (40 if is_v7 else 64) * 1024 * 1024   # v7x: 64 MiB physical/TC

    partials = pl.pallas_call(
        kernel,
        out_shape=jax.ShapeDtypeStruct((num_shards, 1), jnp.float32),
        grid_spec=pltpu.PrefetchScalarGridSpec(
            num_scalar_prefetch=0,
            grid=(num_shards, bps),
            in_specs=[in_spec],
            out_specs=pl.BlockSpec((1, 1), lambda i, j: (i, 0)),
            scratch_shapes=[pltpu.VMEM((8, lane), jnp.float32)],
        ),
        compiler_params=pltpu.CompilerParams(
            dimension_semantics=sems,
            vmem_limit_bytes=vmem_cap),
    )(x2d)
    return jnp.sum(partials)


def sqrt_sum(inp):
    """sum(sqrt(inp)) over all elements (Test1.forward / bottleneck)."""
    x = jnp.asarray(inp)
    flat = x.reshape(-1)                  # no HBM copy
    n = flat.size
    itemsize = jnp.dtype(x.dtype).itemsize
    sub = {1: 32, 2: 16, 4: 8}.get(itemsize, 8)   # sublane packing per dtype

    lane = None
    for cand in (1024, 512, 256, 128):
        if n >= cand * sub and n % (cand * sub) == 0:
            lane = cand
            break

    if lane is not None:
        aligned = n
    else:
        # Awkward size: run the kernel on the aligned prefix, add the tiny
        # ragged remainder (< 128*sub elements) with plain jnp.  No full pad.
        lane = 128
        aligned = (n // (lane * sub)) * (lane * sub)

    rem_sum = None
    if aligned < n:
        rem_sum = jnp.sum(jnp.sqrt(flat[aligned:].astype(jnp.float32)))
    if aligned == 0:
        return rem_sum            # input too small for a single tile

    main = _sqrt_sum_aligned(flat[:aligned], lane, sub, itemsize)
    return main if rem_sum is None else main + rem_sum


if __name__ == "__main__":
    # Small NCHW-style input consistent with the module: (2, 4, 16, 16).
    key = jax.random.PRNGKey(0)
    x = jax.random.uniform(key, (2, 4, 16, 16), dtype=jnp.float32,
                           minval=0.0, maxval=4.0)   # nonnegative for sqrt

    result = sqrt_sum(x)
    jax.block_until_ready(result)

    # Reference check against plain JAX.
    ref = jnp.sum(jnp.sqrt(x))
    assert jnp.allclose(result, ref, rtol=1e-5, atol=1e-5), (result, ref)
    print("KERNEL_OK")
</pallas_src>

<mosaic_0001>
module attributes {stable_mosaic.version = 11 : i64} {
  func.func @kernel(%arg0: i32, %arg1: i32, %arg2: memref<8x256xf32, #tpu.memory_space<vmem>>, %arg3: memref<1x1xf32, #tpu.memory_space<vmem>>, %arg4: memref<8x256xf32, #tpu.memory_space<vmem>>) attributes {dimension_semantics = [#tpu.dimension_semantics<arbitrary>, #tpu.dimension_semantics<arbitrary>], iteration_bounds = array<i64: 1, 1>, scalar_prefetch = 0 : i64, scratch_operands = 1 : i64, tpu.core_type = #tpu.core_type<tc>, window_params = [{transform_indices = @transform_0, window_bounds = array<i64: 8, 256>}, {transform_indices = @transform_1, window_bounds = array<i64: 1, 1>}]} {
    %c0_i32 = arith.constant 0 : i32
    %0 = arith.cmpi eq, %arg1, %c0_i32 : i32
    %1 = arith.extui %0 : i1 to i32
    %c0_i32_0 = arith.constant 0 : i32
    %2 = arith.cmpi ne, %1, %c0_i32_0 : i32
    scf.if %2 {
      %cst = arith.constant 0.000000e+00 : f32
      %17 = vector.broadcast %cst : f32 to vector<8x256xf32>
      %c0 = arith.constant 0 : index
      %c0_9 = arith.constant 0 : index
      %18 = vector.load %arg4[%c0, %c0_9] : memref<8x256xf32, #tpu.memory_space<vmem>>, vector<8x256xf32>
      tpu.vector_store %arg4[%c0, %c0_9], %17 {strides = array<i32>} : memref<8x256xf32, #tpu.memory_space<vmem>>, vector<8x256xf32>,
    } else {
    }
    %c1_i32 = arith.constant 1 : i32
    %3 = arith.muli %arg0, %c1_i32 : i32
    %4 = arith.addi %3, %arg1 : i32
    %c8_i32 = arith.constant 8 : i32
    %5 = arith.muli %4, %c8_i32 : i32
    %c8_i32_1 = arith.constant 8 : i32
    %6 = arith.addi %5, %c8_i32_1 : i32
    %c8_i32_2 = arith.constant 8 : i32
    %7 = arith.cmpi sle, %6, %c8_i32_2 : i32
    %8 = arith.extui %7 : i1 to i32
    %c0_i32_3 = arith.constant 0 : i32
    %9 = arith.cmpi ne, %8, %c0_i32_3 : i32
    scf.if %9 {
      %c0_i32_9 = arith.constant 0 : i32
      %c8_i32_10 = arith.constant 8 : i32
      %17 = arith.muli %c0_i32_9, %c8_i32_10 : i32
      %18 = tpu.assume_multiple %17, 8 : i32
      %19 = arith.index_cast %18 : i32 to index
      %c0 = arith.constant 0 : index
      %20 = vector.load %arg2[%19, %c0] : memref<8x256xf32, #tpu.memory_space<vmem>>, vector<8x256xf32>
      %c0_11 = arith.constant 0 : index
      %c0_12 = arith.constant 0 : index
      %21 = vector.load %arg4[%c0_11, %c0_12] : memref<8x256xf32, #tpu.memory_space<vmem>>, vector<8x256xf32>
      %22 = math.sqrt %20 : vector<8x256xf32>
      %23 = vector.shape_cast %22 : vector<8x256xf32> to vector<1x8x256xf32>
      %cst = arith.constant dense<0.000000e+00> : vector<8x256xf32>
      %24 = vector.multi_reduction <add>, %23, %cst [0] : vector<1x8x256xf32> to vector<8x256xf32>
      %25 = arith.addf %21, %24 : vector<8x256xf32>
      %c0_13 = arith.constant 0 : index
      %c0_14 = arith.constant 0 : index
      %26 = vector.load %arg4[%c0_13, %c0_14] : memref<8x256xf32, #tpu.memory_space<vmem>>, vector<8x256xf32>
      tpu.vector_store %arg4[%c0_13, %c0_14], %25 {strides = array<i32>} : memref<8x256xf32, #tpu.memory_space<vmem>>, vector<8x256xf32>,
      %c1_i32_15 = arith.constant 1 : i32
    } else {
    }
    %c8_i32_4 = arith.constant 8 : i32
    %10 = arith.addi %5, %c8_i32_4 : i32
    %c8_i32_5 = arith.constant 8 : i32
    %11 = arith.cmpi sgt, %10, %c8_i32_5 : i32
    %12 = arith.extui %11 : i1 to i32
    %c0_i32_6 = arith.constant 0 : i32
    %13 = arith.cmpi ne, %12, %c0_i32_6 : i32
    scf.if %13 {
      %c0_i32_9 = arith.constant 0 : i32
      %c8_i32_10 = arith.constant 8 : i32
      %17 = arith.muli %c0_i32_9, %c8_i32_10 : i32
      %18 = tpu.assume_multiple %17, 8 : i32
      %19 = arith.addi %5, %18 : i32
      %20 = tpu.iota {dimensions = array<i32: 0>} : vector<8x256xi32>
      %21 = vector.broadcast %19 : i32 to vector<8x256xi32>
      %22 = arith.addi %21, %20 : vector<8x256xi32>
      %23 = arith.index_cast %18 : i32 to index
      %c0 = arith.constant 0 : index
      %24 = vector.load %arg2[%23, %c0] : memref<8x256xf32, #tpu.memory_space<vmem>>, vector<8x256xf32>
      %c8_i32_11 = arith.constant 8 : i32
      %25 = vector.broadcast %c8_i32_11 : i32 to vector<8x256xi32>
      %26 = arith.cmpi slt, %22, %25 : vector<8x256xi32>
      %cst = arith.constant 0.000000e+00 : f32
      %27 = vector.broadcast %cst : f32 to vector<8x256xf32>
      %28 = arith.select %26, %24, %27 : vector<8x256xi1>, vector<8x256xf32>
      %c0_12 = arith.constant 0 : index
      %c0_13 = arith.constant 0 : index
      %29 = vector.load %arg4[%c0_12, %c0_13] : memref<8x256xf32, #tpu.memory_space<vmem>>, vector<8x256xf32>
      %30 = math.sqrt %28 : vector<8x256xf32>
      %31 = vector.shape_cast %30 : vector<8x256xf32> to vector<1x8x256xf32>
      %cst_14 = arith.constant dense<0.000000e+00> : vector<8x256xf32>
      %32 = vector.multi_reduction <add>, %31, %cst_14 [0] : vector<1x8x256xf32> to vector<8x256xf32>
      %33 = arith.addf %29, %32 : vector<8x256xf32>
      %c0_15 = arith.constant 0 : index
      %c0_16 = arith.constant 0 : index
      %34 = vector.load %arg4[%c0_15, %c0_16] : memref<8x256xf32, #tpu.memory_space<vmem>>, vector<8x256xf32>
      tpu.vector_store %arg4[%c0_15, %c0_16], %33 {strides = array<i32>} : memref<8x256xf32, #tpu.memory_space<vmem>>, vector<8x256xf32>,
      %c1_i32_17 = arith.constant 1 : i32
    } else {
    }
    %c0_i32_7 = arith.constant 0 : i32
    %14 = arith.cmpi eq, %arg1, %c0_i32_7 : i32
    %15 = arith.extui %14 : i1 to i32
    %c0_i32_8 = arith.constant 0 : i32
    %16 = arith.cmpi ne, %15, %c0_i32_8 : i32
    scf.if %16 {
      %c0 = arith.constant 0 : index
      %c0_9 = arith.constant 0 : index
      %17 = vector.load %arg4[%c0, %c0_9] : memref<8x256xf32, #tpu.memory_space<vmem>>, vector<8x256xf32>
      %18 = vector.shape_cast %17 : vector<8x256xf32> to vector<1x8x256xf32>
      %cst = arith.constant dense<0.000000e+00> : vector<1xf32>
      %19 = vector.multi_reduction <add>, %18, %cst [1, 2] : vector<1x8x256xf32> to vector<1xf32>
      %20 = vector.shape_cast %19 : vector<1xf32> to vector<1x1x1xf32>
      %21 = vector.extract %20[0, 0, 0] : f32 from vector<1x1x1xf32>
      %22 = vector.broadcast %21 : f32 to vector<1x1xf32>
      %c0_10 = arith.constant 0 : index
      %c0_11 = arith.constant 0 : index
      %23 = vector.load %arg3[%c0_10, %c0_11] : memref<1x1xf32, #tpu.memory_space<vmem>>, vector<1x1xf32>
      tpu.vector_store %arg3[%c0_10, %c0_11], %22 {strides = array<i32>} : memref<1x1xf32, #tpu.memory_space<vmem>>, vector<1x1xf32>,
    } else {
    }
    return
  }
  func.func @transform_0(%arg0: i32, %arg1: i32) -> (i32, i32) {
    %c1_i32 = arith.constant 1 : i32
    %0 = arith.muli %arg0, %c1_i32 : i32
    %1 = arith.addi %0, %arg1 : i32
    %c0_i32 = arith.constant 0 : i32
    %2 = arith.minsi %1, %c0_i32 : i32
    %c0_i32_0 = arith.constant 0 : i32
    %c0_i32_1 = arith.constant 0 : i32
    return %2, %c0_i32_0 : i32, i32
  }
  func.func @transform_1(%arg0: i32, %arg1: i32) -> (i32, i32) {
    %c0_i32 = arith.constant 0 : i32
    %c0_i32_0 = arith.constant 0 : i32
    return %arg0, %c0_i32 : i32, i32
  }
}

</mosaic_0001>

<llo_original>
// kernel: tpu_custom_call.1
$region0: #{tpu_custom_call.1}
  #allocation0 [shape = 'u32[]', space=smem, size = 0x4, offset = 0x4, fixed_abs, tag = 'smem constant byte address 0x4 - core index']
  #allocation1 [shape = 'u32[144,128]{1,0:T(1,128)}', space=vmem, size = 0x12000, scoped, tag = 'internal scratch']
  #allocation2 [shape = 'f32[8,256]{1,0:T(8,128)}', space=vmem, size = 0x2000, scoped, tag = 'scratch operand']
  %s0 = inlined_call_operand.hbm [shape: f32[8,256], index: 0, kind: input, shape index: {}]
  %s1 = inlined_call_operand.hbm [shape: f32[1,1], index: 1, kind: output, shape index: {}]
  %s2 = sld [smem:[#allocation0]]
  $region34: #{tpu_custom_call.1} parent=0
    _
  %s4 = ssub.s32 1, %s2
  %s5 = scalar_select 0, %s4, %s2
  $region1: #{tpu_custom_call.1} parent=0
    #allocation3 [shape = 'u8[8192]{0}', space=vmem, size = 0x2000, scoped, tag = 'input window, operand 0, single buffered']
    #allocation4 [shape = 's32[1]{0}', space=sflag, size = 0x4, scoped, tag = 'scoped memory for tpu_custom_call.1']
    #allocation5 [shape = 's32[1]{0}', space=sflag, size = 0x4, scoped, tag = 'scoped memory for tpu_custom_call.1']
    #allocation6 [shape = 'u8[512]{0}', space=vmem, size = 0x400, scoped, tag = 'output window, operand 0, single buffered']
    %6 = vsyncpa [#allocation4], 0
    %7 = vsyncpa [#allocation5], 0
    // Predicated region
    $region2: #{tpu_custom_call.1} parent=1 // pred_check
      _
    $region3: #{tpu_custom_call.1} parent=1 // pred_check_branch
      %9 = sbr.rel (0) target = $region5
    $region4: #{tpu_custom_call.1} parent=1 // pred_region
      %s10 = sadd.s32 0, 0
      %p11 = scmp.lt.s32.totalorder %s10, 0
      %s12 = scalar_select %p11, %s10, 0
      %s14 = ssub.s32 256, 256
      %15 = vsyncadd [#allocation4], %s14
      %s16 = smul.addr %s12, 2
      %s17 = smul.addr %s16, 128
      %s18 = scalar_lea.hbm %s0, %s17
      %s20 = sshll.u32 [#allocation3], 4
      %s21 = int_to_ptr.vmem [resolvable:$true] %s20
      %23 = dma.hbm_to_vmem [thread:$0]  %s18, 256, %s21, [#allocation4]
    $region5: #{tpu_custom_call.1} parent=1 // pred_fallthru
      _
    // Predicated region
    $region6: #{tpu_custom_call.1} parent=1 // pred_check
      _
    $region7: #{tpu_custom_call.1} parent=1 // pred_check_branch
      %25 = sbr.rel (0) target = $region9
    $region8: #{tpu_custom_call.1} parent=1 // pred_region
      %26 = dma.done [#allocation4], 256
    $region9: #{tpu_custom_call.1} parent=1 // pred_fallthru
      _
    %s27 = sadd.s32 0, 0
    %p28 = scmp.lt.s32.totalorder %s27, 0
    %s29 = scalar_select %p28, %s27, 0
    %p30 = scmp.eq.s32.totalorder 0, 0
    // Predicated region
    $region10: #{tpu_custom_call.1} parent=1 // pred_check
      %p31 = pneg %p30
    $region11: #{tpu_custom_call.1} parent=1 // pred_check_branch
      %33 = sbr.rel (%p31) target = $region13
    $region12: #{tpu_custom_call.1} parent=1 // pred_region
      %34 = vst [vmem:[#allocation2] sm:$0xff] 0.0
      %35 = vst [vmem:[#allocation2 + $0x8] sm:$0xff] 0.0
    $region13: #{tpu_custom_call.1} parent=1 // pred_fallthru
      _
    %s36 = sadd.s32 0, 0
    %s37 = smul.u32 %s36, 8
    %s38 = sadd.s32 %s37, 8
    %p39 = scmp.le.s32.totalorder %s38, 8
    // Predicated region
    $region14: #{tpu_custom_call.1} parent=1 // pred_check
      %p40 = pneg %p39
    $region15: #{tpu_custom_call.1} parent=1 // pred_check_branch
      %42 = sbr.rel (%p40) target = $region17
    $region16: #{tpu_custom_call.1} parent=1 // pred_region
      %s43 = smul.u32 0, 2
      %s44 = smul.addr %s43, 8
      %s45 = scalar_lea.vmem [#allocation3], %s44
      %v46 = vld [vmem:[%s45] sm:$0xff]
      %v47 = vld [vmem:[%s45 + $0x8] sm:$0xff]
      %v48 = vld [vmem:[#allocation2] sm:$0xff]
      %v49 = vld [vmem:[#allocation2 + $0x8] sm:$0xff]
      %v50 = vrsqrt.pop %v46
      %v51 = vmul.f32 %v46, %v50
      %vm52 = vcmp.eq.f32.partialorder %v46, inf
      %v53 = vsel %vm52, %v46, %v51
      %vm54 = vcmp.eq.f32.partialorder %v46, 0.0
      %v55 = vand.u32 %v46, 2147483648
      %v56 = vsel %vm54, %v55, %v53
      %v57 = vrsqrt.pop %v47
      %v58 = vmul.f32 %v47, %v57
      %vm59 = vcmp.eq.f32.partialorder %v47, inf
      %v60 = vsel %vm59, %v47, %v58
      %vm61 = vcmp.eq.f32.partialorder %v47, 0.0
      %v62 = vand.u32 %v47, 2147483648
      %v63 = vsel %vm61, %v62, %v60
      %v64 = vadd.f32 %v56, 0.0
      %v65 = vadd.f32 %v63, 0.0
      %v66 = vadd.f32 %v48, %v64
      %v67 = vadd.f32 %v49, %v65
      %68 = vst [vmem:[#allocation2] sm:$0xff] %v66
      %69 = vst [vmem:[#allocation2 + $0x8] sm:$0xff] %v67
    $region17: #{tpu_custom_call.1} parent=1 // pred_fallthru
      _
    %p70 = scmp.gt.s32.totalorder %s38, 8
    // Predicated region
    $region18: #{tpu_custom_call.1} parent=1 // pred_check
      %p71 = pneg %p70
    $region19: #{tpu_custom_call.1} parent=1 // pred_check_branch
      %73 = sbr.rel (%p71) target = $region21
    $region20: #{tpu_custom_call.1} parent=1 // pred_region
      %s74 = sadd.s32 %s37, 0
      %v75 = vlaneseq
      %v76 = vshrl.u32 %v75, 7
      %v77 = vstv %s74
      %v78 = vadd.s32 %v77, %v76
      %s79 = smul.u32 0, 2
      %s80 = smul.addr %s79, 8
      %s81 = scalar_lea.vmem [#allocation3], %s80
      %v82 = vld [vmem:[%s81] sm:$0xff]
      %v83 = vld [vmem:[%s81 + $0x8] sm:$0xff]
      %vm84 = vcmp.lt.s32.totalorder %v78, 8
      %v85 = vsel %vm84, %v82, 0.0
      %v86 = vsel %vm84, %v83, 0.0
      %v87 = vld [vmem:[#allocation2] sm:$0xff]
      %v88 = vld [vmem:[#allocation2 + $0x8] sm:$0xff]
      %v89 = vrsqrt.pop %v85
      %v90 = vmul.f32 %v85, %v89
      %vm91 = vcmp.eq.f32.partialorder %v85, inf
      %v92 = vsel %vm91, %v85, %v90
      %vm93 = vcmp.eq.f32.partialorder %v85, 0.0
      %v94 = vand.u32 %v85, 2147483648
      %v95 = vsel %vm93, %v94, %v92
      %v96 = vrsqrt.pop %v86
      %v97 = vmul.f32 %v86, %v96
      %vm98 = vcmp.eq.f32.partialorder %v86, inf
      %v99 = vsel %vm98, %v86, %v97
      %vm100 = vcmp.eq.f32.partialorder %v86, 0.0
      %v101 = vand.u32 %v86, 2147483648
      %v102 = vsel %vm100, %v101, %v99
      %v103 = vadd.f32 %v95, 0.0
      %v104 = vadd.f32 %v102, 0.0
      %v105 = vadd.f32 %v87, %v103
      %v106 = vadd.f32 %v88, %v104
      %107 = vst [vmem:[#allocation2] sm:$0xff] %v105
      %108 = vst [vmem:[#allocation2 + $0x8] sm:$0xff] %v106
    $region21: #{tpu_custom_call.1} parent=1 // pred_fallthru
      _
    // Predicated region
    $region22: #{tpu_custom_call.1} parent=1 // pred_check
      %p109 = pneg %p30
    $region23: #{tpu_custom_call.1} parent=1 // pred_check_branch
      %111 = sbr.rel (%p109) target = $region25
    $region24: #{tpu_custom_call.1} parent=1 // pred_region
      %v112 = vld [vmem:[#allocation2] sm:$0xff]
      %v113 = vld [vmem:[#allocation2 + $0x8] sm:$0xff]
      %v114 = vadd.f32 %v112, %v113
      %115 = vadd.xlane.f32.xlu0 %v114
      %v116 = vpop.xlane.xlu0 %115
      %v117 = vrot.slane %v116, 4
      %v118 = vadd.f32 %v116, %v117
      %v119 = vrot.slane %v118, 2
      %v120 = vadd.f32 %v118, %v119
      %v121 = vrot.slane %v120, 1
      %v122 = vadd.f32 %v120, %v121
      %s123 = vtos %v122
      %v124 = vstv %s123
      %vm125 = vcmask 0
      %126 = vst.msk [vmem:[#allocation6] sm:$0x1] %vm125, %v124
    $region25: #{tpu_custom_call.1} parent=1 // pred_fallthru
      _
    // Predicated region
    $region26: #{tpu_custom_call.1} parent=1 // pred_check
      _
    $region27: #{tpu_custom_call.1} parent=1 // pred_check_branch
      %128 = sbr.rel (0) target = $region29
    $region28: #{tpu_custom_call.1} parent=1 // pred_region
      %s130 = ssub.s32 16, 16
      %131 = vsyncadd [#allocation5], %s130
      %s133 = sshll.u32 [#allocation6], 4
      %s134 = int_to_ptr.vmem [resolvable:$true] %s133
      %136 = dma.vmem_to_hbm [thread:$0]  %s134, 16, %s1, [#allocation5]
    $region29: #{tpu_custom_call.1} parent=1 // pred_fallthru
      _
    // Predicated region
    $region30: #{tpu_custom_call.1} parent=1 // pred_check
      _
    $region31: #{tpu_custom_call.1} parent=1 // pred_check_branch
      %138 = sbr.rel (0) target = $region33
    $region32: #{tpu_custom_call.1} parent=1 // pred_region
      %139 = dma.done [#allocation5], 16
    $region33: #{tpu_custom_call.1} parent=1 // pred_fallthru
      _
    %140 = vsyncpa [#allocation4], 1
    %141 = vsyncpa [#allocation5], 1

</llo_original>
